<compile_context>
chip_gen: v7x
topology: tpu7x:2x2x1
jax: 0.10.0
libtpu: 0.0.40
codegen_flags: <defaults>
</compile_context>

<pallas_src>
import functools

import jax
import jax.numpy as jnp
from jax import lax
from jax.experimental import pallas as pl
from jax.experimental.pallas import tpu as pltpu

_LANE = 128
_SUBLANE = 16
_EPS = 1e-5
_B_TILE_MAX = 1024


def _round_up(n, m):
    return ((n + m - 1) // m) * m


def _dims(cfg):
    T, F = cfg["time_step"], cfg["feat_dim"]
    M, FS, PS = cfg["num_maps"], cfg["filter_size"], cfg["pooling_size"]
    H, C = cfg["conn_dim"], cfg["num_classes"]
    W_OUT = F - FS + 1                       # get_conv_output_size(F, 0, FS, 1)
    P_OUT = (W_OUT - PS) // PS + 1           # get_conv_output_size(W_OUT, 0, PS, PS)
    D = M * P_OUT                            # DNN input size
    K1 = T * F                               # flattened conv contraction dim
    return dict(T=T, F=F, M=M, FS=FS, PS=PS, H=H, C=C,
                W_OUT=W_OUT, P_OUT=P_OUT, D=D, K1=K1,
                K1P=_round_up(K1, _LANE), DP=_round_up(D, _LANE),
                HP=_round_up(H, _LANE), CP=_round_up(C, _LANE))


def prepare_cnn_params(params, cfg, mxu_dtype):
    """Host-side (run ONCE): unfolded conv weight, pre-transposed Linears, BN fold."""
    d = _dims(cfg)
    T, F, M, FS, PS = d["T"], d["F"], d["M"], d["FS"], d["PS"]
    P_OUT, D, K1 = d["P_OUT"], d["D"], d["K1"]
    K1P, DP, HP, CP = d["K1P"], d["DP"], d["HP"], d["CP"]
    H, C = d["H"], d["C"]
    f32 = jnp.float32

    # ---- Toeplitz/unfolded conv weight ----------------------------------
    # wcu[t*F + j, s*DP + m*P_OUT + p] = wc[m, t, f]  where  j = p*PS + s + f
    # so  x.reshape(B, T*F) @ wcu  gives conv output at position w = p*PS + s
    # for channel m, already in (s, m, p) column order (tail positions of the
    # floor-mode max-pool are simply never generated).
    wc = params["wc"].reshape(M, T, FS).astype(f32)
    j = jnp.arange(F)[None, :, None, None]
    s = jnp.arange(PS)[None, None, :, None]
    p = jnp.arange(P_OUT)[None, None, None, :]
    f = jnp.arange(FS)[:, None, None, None]
    onehot = (j == p * PS + s + f).astype(f32)                  # (FS, F, PS, P_OUT)
    wcu = jnp.einsum("mtf,fjsp->tjsmp", wc, onehot,
                     precision=lax.Precision.HIGHEST)           # (T, F, PS, M, P_OUT)
    wcu = wcu.reshape(K1, PS, D)
    wcu = jnp.pad(wcu, ((0, K1P - K1), (0, 0), (0, DP - D)))
    wcu = wcu.reshape(K1P, PS * DP).astype(mxu_dtype)

    bc = params["bc"].reshape(M).astype(f32)
    bcu = jnp.broadcast_to(bc[:, None], (M, P_OUT)).reshape(1, D)
    bcu = jnp.pad(bcu, ((0, 0), (0, DP - D)))
    bcu = jnp.tile(bcu, (1, PS))                                # (1, PS*DP), f32

    # ---- Linear 1 (pre-transposed, zero-padded) --------------------------
    w1t = jnp.pad(params["w1"].astype(f32).T, ((0, DP - D), (0, HP - H)))
    w1t = w1t.astype(mxu_dtype)                                 # (DP, HP)
    b1 = jnp.pad(params["b1"].reshape(1, H).astype(f32), ((0, 0), (0, HP - H)))

    # ---- Fold eval-mode BatchNorm1d into Linear 2 -------------------------
    # z = relu_h * a + shift ;  y = z @ w2.T + b2
    #   = relu_h @ (w2 * a).T + (shift @ w2.T + b2)
    a = params["gamma"].reshape(H).astype(f32) * lax.rsqrt(
        params["var"].reshape(H).astype(f32) + _EPS)
    shift = params["beta"].reshape(H).astype(f32) - params["mean"].reshape(H).astype(f32) * a
    w2 = params["w2"].astype(f32)                               # (C, H)
    w2t = jnp.pad((w2 * a[None, :]).T, ((0, HP - H), (0, CP - C)))
    w2t = w2t.astype(mxu_dtype)                                 # (HP, CP)
    b2 = params["b2"].reshape(C).astype(f32) + (w2 * shift[None, :]).sum(axis=1)
    b2 = jnp.pad(b2.reshape(1, C), ((0, 0), (0, CP - C)))       # (1, CP), f32

    prep = dict(wcu=wcu, bcu=bcu, w1t=w1t, b1=b1, w2t=w2t, b2=b2)
    prep = jax.tree_util.tree_map(jnp.asarray, prep)
    return prep, d


def _cnn_kernel(ps, dp, x_ref, wcu_ref, bcu_ref, w1_ref, b1_ref, w2_ref, b2_ref,
                out_ref):
    mxu_dtype = wcu_ref.dtype
    xf = x_ref[...]                                              # (Bt, K1P)

    # Conv2d(+bias)+ReLU == one MXU matmul against the unfolded weight.
    conv = jnp.dot(xf, wcu_ref[...], preferred_element_type=jnp.float32)
    conv = jnp.maximum(conv + bcu_ref[...], 0.0)                 # (Bt, PS*DP) f32

    # MaxPool1d(PS, stride=PS): max over PS lane-aligned 128-wide slices.
    # Result is already channel-major (m, p) = PyTorch's flatten order.
    pooled = conv[:, :dp]
    for s in range(1, ps):
        pooled = jnp.maximum(pooled, conv[:, s * dp:(s + 1) * dp])

    # DNN: Linear -> Dropout(eval: identity) -> ReLU -> [BN folded] -> Linear
    h = jnp.dot(pooled.astype(mxu_dtype), w1_ref[...],
                preferred_element_type=jnp.float32)
    h = jnp.maximum(h + b1_ref[...], 0.0)                        # (Bt, HP) f32
    y = jnp.dot(h.astype(mxu_dtype), w2_ref[...],
                preferred_element_type=jnp.float32)
    out_ref[...] = (y + b2_ref[...]).astype(out_ref.dtype)       # (Bt, CP)


def _pick_batch_tiling(B, b_tile_max):
    """Adaptive batch tiling (static, from shapes)."""
    if B < _LANE:
        # Single full-array block (exempt from the (8/16,128) divisibility rule):
        # no 64x padding waste for tiny batches.
        b_pad = _round_up(max(B, 1), _SUBLANE)
        return b_pad, b_pad, 1
    # Large tiles to amortize the ~0.35us grid-step overhead, but cap at
    # round_up(cdiv(B,2),128) so there are >=2 blocks -> both v7x TCs get work.
    b_tile = max(_LANE, min(b_tile_max, _round_up(pl.cdiv(B, 2), _LANE)))
    b_pad = _round_up(B, b_tile)
    return b_pad, b_tile, b_pad // b_tile


def _cnn_forward_prepared(x, prep, d, num_classes, *, mxu_dtype, out_dtype,
                          b_tile_max):
    PS, DP, K1, K1P, HP, CP = d["PS"], d["DP"], d["K1"], d["K1P"], d["HP"], d["CP"]

    B = x.shape[0]
    b_pad, b_tile, n_blocks = _pick_batch_tiling(B, b_tile_max)

    xf = x.reshape(B, K1)
    xf = jnp.pad(xf, ((0, b_pad - B), (0, K1P - K1))).astype(mxu_dtype)

    kernel = functools.partial(_cnn_kernel, PS, DP)

    # Grid-invariant weights/biases: single-buffered (no overlap to gain).
    once = {"pipeline_mode": pl.Buffered(1)} if hasattr(pl, "Buffered") else {}

    mxu_bytes = jnp.dtype(mxu_dtype).itemsize
    out_bytes = jnp.dtype(out_dtype).itemsize
    flops = 2 * b_pad * (K1P * PS * DP + DP * HP + HP * CP)
    bytes_accessed = (b_pad * K1P * mxu_bytes
                      + (K1P * PS * DP + DP * HP + HP * CP) * mxu_bytes
                      + (PS * DP + HP + CP) * 4
                      + b_pad * CP * out_bytes)

    out = pl.pallas_call(
        kernel,
        out_shape=jax.ShapeDtypeStruct((b_pad, CP), out_dtype),
        grid=(n_blocks,),
        in_specs=[
            pl.BlockSpec((b_tile, K1P), lambda i: (i, 0)),             # x: batch-tiled
            pl.BlockSpec((K1P, PS * DP), lambda i: (0, 0), **once),    # unfolded conv W
            pl.BlockSpec((1, PS * DP), lambda i: (0, 0), **once),      # conv bias
            pl.BlockSpec((DP, HP), lambda i: (0, 0), **once),          # w1^T (padded)
            pl.BlockSpec((1, HP), lambda i: (0, 0), **once),           # b1
            pl.BlockSpec((HP, CP), lambda i: (0, 0), **once),          # (w2*a)^T (padded)
            pl.BlockSpec((1, CP), lambda i: (0, 0), **once),           # b2 (BN folded)
        ],
        out_specs=pl.BlockSpec((b_tile, CP), lambda i: (i, 0)),        # lane-dense out
        compiler_params=pltpu.CompilerParams(
            dimension_semantics=("parallel",)),                        # shard batch on v7x
        cost_estimate=pl.CostEstimate(flops=flops, transcendentals=0,
                                      bytes_accessed=bytes_accessed),
    )(xf, prep["wcu"], prep["bcu"], prep["w1t"], prep["b1"], prep["w2t"], prep["b2"])

    return out[:B, :num_classes].astype(jnp.float32)


def make_cnn_forward(params, cfg, *, mxu_dtype=jnp.bfloat16,
                     out_dtype=jnp.bfloat16, b_tile_max=_B_TILE_MAX):
    """Prepare (unfold/fold/pad) weights ONCE; return a jitted forward."""
    prep, d = prepare_cnn_params(params, cfg, mxu_dtype)
    num_classes = cfg["num_classes"]

    @jax.jit
    def fwd(x):
        return _cnn_forward_prepared(x, prep, d, num_classes,
                                     mxu_dtype=mxu_dtype, out_dtype=out_dtype,
                                     b_tile_max=b_tile_max)

    return fwd


def reference_forward(x, params, cfg):
    """Pure-JAX reference (lax.conv, eval-mode Dropout/BN) for checking."""
    B = x.shape[0]
    M, T, FS, PS = cfg["num_maps"], cfg["time_step"], cfg["filter_size"], cfg["pooling_size"]
    hi = lax.Precision.HIGHEST
    x4 = x[:, None, :, :]                                        # NCHW (B,1,T,F)
    wc4 = params["wc"].reshape(M, 1, T, FS)                      # OIHW
    conv = lax.conv_general_dilated(x4, wc4, (1, 1), "VALID",
                                    dimension_numbers=("NCHW", "OIHW", "NCHW"),
                                    precision=hi)
    conv = jnp.maximum(conv + params["bc"].reshape(1, M, 1, 1), 0.0)
    conv = conv.reshape(B, M, -1)
    W = conv.shape[-1]
    P = (W - PS) // PS + 1
    pooled = conv[:, :, :P * PS].reshape(B, M, P, PS).max(-1)
    flat = pooled.reshape(B, M * P)
    h = jnp.dot(flat, params["w1"].T, precision=hi) + params["b1"]
    h = jnp.maximum(h, 0.0)
    h = (h - params["mean"]) * lax.rsqrt(params["var"] + _EPS) * params["gamma"] + params["beta"]
    return jnp.dot(h, params["w2"].T, precision=hi) + params["b2"]


if __name__ == "__main__":
    cfg = dict(B=2, time_step=8, feat_dim=16, num_maps=8,
               pooling_size=2, filter_size=3, conn_dim=32, num_classes=4)

    W_OUT = cfg["feat_dim"] - cfg["filter_size"] + 1                  # 14
    P_OUT = (W_OUT - cfg["pooling_size"]) // cfg["pooling_size"] + 1  # 7
    DNN_IN = cfg["num_maps"] * P_OUT                                  # 56
    H, C = cfg["conn_dim"], cfg["num_classes"]
    KFLAT = cfg["time_step"] * cfg["filter_size"]

    key = jax.random.PRNGKey(0)
    ks = jax.random.split(key, 12)
    f32 = jnp.float32
    params = {
        # Conv2d(1, num_maps, (time_step, filter_size)) weight flattened to (M, T*FS)
        "wc": (jax.random.normal(ks[0], (cfg["num_maps"], KFLAT), f32) * 0.2),
        "bc": (jax.random.normal(ks[1], (1, cfg["num_maps"]), f32) * 0.1),
        # DNN Linear(DNN_IN -> H)
        "w1": (jax.random.normal(ks[2], (H, DNN_IN), f32) * (1.0 / jnp.sqrt(DNN_IN))),
        "b1": (jax.random.normal(ks[3], (1, H), f32) * 0.05),
        # BatchNorm1d(H) eval-mode parameters / running stats
        "gamma": 0.5 + jax.random.uniform(ks[4], (1, H), f32),
        "beta": (jax.random.normal(ks[5], (1, H), f32) * 0.1),
        "mean": (jax.random.normal(ks[6], (1, H), f32) * 0.1),
        "var": 0.5 + jax.random.uniform(ks[7], (1, H), f32),
        # DNN Linear(H -> C)
        "w2": (jax.random.normal(ks[8], (C, H), f32) * (1.0 / jnp.sqrt(H))),
        "b2": (jax.random.normal(ks[9], (1, C), f32) * 0.05),
    }

    x = jax.random.normal(ks[10], (cfg["B"], cfg["time_step"], cfg["feat_dim"]), f32)
    ref = reference_forward(x, params, cfg)

    # --- f32 MXU-input + f32 output path: tight correctness check. --------
    fwd_f32 = make_cnn_forward(params, cfg, mxu_dtype=jnp.float32,
                               out_dtype=jnp.float32)
    out_f32 = jax.block_until_ready(fwd_f32(x))
    assert out_f32.shape == (cfg["B"], cfg["num_classes"])
    assert jnp.allclose(out_f32, ref, rtol=2e-3, atol=2e-3), (out_f32, ref)

    # --- exercise the multi-block (tiled, >=2 grid steps) path. ------------
    x_big = jax.random.normal(ks[11], (300, cfg["time_step"], cfg["feat_dim"]), f32)
    ref_big = reference_forward(x_big, params, cfg)
    out_big = jax.block_until_ready(fwd_f32(x_big))
    assert out_big.shape == (300, cfg["num_classes"])
    assert jnp.allclose(out_big, ref_big, rtol=2e-3, atol=2e-3)

    # --- default perf path: bf16 MXU inputs + bf16 writeback (looser tol). -
    fwd_bf16 = make_cnn_forward(params, cfg)   # bf16 weights/acts, bf16 output
    out_bf16 = jax.block_until_ready(fwd_bf16(x))
    assert out_bf16.shape == (cfg["B"], cfg["num_classes"])
    assert jnp.allclose(out_bf16, ref, rtol=1e-1, atol=1e-1), (out_bf16, ref)

    print("KERNEL_OK")
</pallas_src>

<mosaic_0001>
module attributes {stable_mosaic.version = 11 : i64} {
  func.func @_cnn_kernel(%arg0: i32, %arg1: memref<16x128xf32, #tpu.memory_space<vmem>>, %arg2: memref<128x256xf32, #tpu.memory_space<vmem>>, %arg3: memref<1x256xf32, #tpu.memory_space<vmem>>, %arg4: memref<128x128xf32, #tpu.memory_space<vmem>>, %arg5: memref<1x128xf32, #tpu.memory_space<vmem>>, %arg6: memref<128x128xf32, #tpu.memory_space<vmem>>, %arg7: memref<1x128xf32, #tpu.memory_space<vmem>>, %arg8: memref<16x128xf32, #tpu.memory_space<vmem>>) attributes {dimension_semantics = [#tpu.dimension_semantics<parallel>], iteration_bounds = array<i64: 1>, scalar_prefetch = 0 : i64, scratch_operands = 0 : i64, tpu.core_type = #tpu.core_type<tc>, window_params = [{transform_indices = @transform_0, window_bounds = array<i64: 16, 128>}, {pipeline_mode = #tpu.pipeline_mode<synchronous>, transform_indices = @transform_1, window_bounds = array<i64: 128, 256>}, {pipeline_mode = #tpu.pipeline_mode<synchronous>, transform_indices = @transform_2, window_bounds = array<i64: 1, 256>}, {pipeline_mode = #tpu.pipeline_mode<synchronous>, transform_indices = @transform_3, window_bounds = array<i64: 128, 128>}, {pipeline_mode = #tpu.pipeline_mode<synchronous>, transform_indices = @transform_4, window_bounds = array<i64: 1, 128>}, {pipeline_mode = #tpu.pipeline_mode<synchronous>, transform_indices = @transform_5, window_bounds = array<i64: 128, 128>}, {pipeline_mode = #tpu.pipeline_mode<synchronous>, transform_indices = @transform_6, window_bounds = array<i64: 1, 128>}, {transform_indices = @transform_7, window_bounds = array<i64: 16, 128>}]} {
    %c0 = arith.constant 0 : index
    %c0_0 = arith.constant 0 : index
    %0 = vector.load %arg1[%c0, %c0_0] : memref<16x128xf32, #tpu.memory_space<vmem>>, vector<16x128xf32>
    %c0_1 = arith.constant 0 : index
    %c0_2 = arith.constant 0 : index
    %1 = vector.load %arg2[%c0_1, %c0_2] : memref<128x256xf32, #tpu.memory_space<vmem>>, vector<128x256xf32>
    %cst = arith.constant dense<0.000000e+00> : vector<16x256xf32>
    %2 = tpu.matmul %0, %1, %cst {dimension_numbers = #tpu.dot_dimension_numbers<[1], [0], [0], [1], [0, 0, 1, 1], [], []>} : vector<16x128xf32>, vector<128x256xf32>, vector<16x256xf32> -> vector<16x256xf32>
    %c0_3 = arith.constant 0 : index
    %c0_4 = arith.constant 0 : index
    %3 = vector.load %arg3[%c0_3, %c0_4] : memref<1x256xf32, #tpu.memory_space<vmem>>, vector<1x256xf32>
    %4 = vector.broadcast %3 : vector<1x256xf32> to vector<16x256xf32>
    %5 = arith.addf %2, %4 : vector<16x256xf32>
    %cst_5 = arith.constant 0.000000e+00 : f32
    %6 = vector.broadcast %cst_5 : f32 to vector<16x256xf32>
    %7 = arith.maximumf %5, %6 : vector<16x256xf32>
    %8 = vector.extract_strided_slice %7 {offsets = [0, 0], sizes = [16, 128], strides = [1, 1]} : vector<16x256xf32> to vector<16x128xf32>
    %9 = vector.extract_strided_slice %7 {offsets = [0, 128], sizes = [16, 128], strides = [1, 1]} : vector<16x256xf32> to vector<16x128xf32>
    %10 = arith.maximumf %8, %9 : vector<16x128xf32>
    %c0_6 = arith.constant 0 : index
    %c0_7 = arith.constant 0 : index
    %11 = vector.load %arg4[%c0_6, %c0_7] : memref<128x128xf32, #tpu.memory_space<vmem>>, vector<128x128xf32>
    %cst_8 = arith.constant dense<0.000000e+00> : vector<16x128xf32>
    %12 = tpu.matmul %10, %11, %cst_8 {dimension_numbers = #tpu.dot_dimension_numbers<[1], [0], [0], [1], [0, 0, 1, 1], [], []>} : vector<16x128xf32>, vector<128x128xf32>, vector<16x128xf32> -> vector<16x128xf32>
    %c0_9 = arith.constant 0 : index
    %c0_10 = arith.constant 0 : index
    %13 = vector.load %arg5[%c0_9, %c0_10] : memref<1x128xf32, #tpu.memory_space<vmem>>, vector<1x128xf32>
    %14 = vector.broadcast %13 : vector<1x128xf32> to vector<16x128xf32>
    %15 = arith.addf %12, %14 : vector<16x128xf32>
    %cst_11 = arith.constant 0.000000e+00 : f32
    %16 = vector.broadcast %cst_11 : f32 to vector<16x128xf32>
    %17 = arith.maximumf %15, %16 : vector<16x128xf32>
    %c0_12 = arith.constant 0 : index
    %c0_13 = arith.constant 0 : index
    %18 = vector.load %arg6[%c0_12, %c0_13] : memref<128x128xf32, #tpu.memory_space<vmem>>, vector<128x128xf32>
    %cst_14 = arith.constant dense<0.000000e+00> : vector<16x128xf32>
    %19 = tpu.matmul %17, %18, %cst_14 {dimension_numbers = #tpu.dot_dimension_numbers<[1], [0], [0], [1], [0, 0, 1, 1], [], []>} : vector<16x128xf32>, vector<128x128xf32>, vector<16x128xf32> -> vector<16x128xf32>
    %c0_15 = arith.constant 0 : index
    %c0_16 = arith.constant 0 : index
    %20 = vector.load %arg7[%c0_15, %c0_16] : memref<1x128xf32, #tpu.memory_space<vmem>>, vector<1x128xf32>
    %21 = vector.broadcast %20 : vector<1x128xf32> to vector<16x128xf32>
    %22 = arith.addf %19, %21 : vector<16x128xf32>
    %c0_17 = arith.constant 0 : index
    %c0_18 = arith.constant 0 : index
    %23 = vector.load %arg8[%c0_17, %c0_18] : memref<16x128xf32, #tpu.memory_space<vmem>>, vector<16x128xf32>
    tpu.vector_store %arg8[%c0_17, %c0_18], %22 {strides = array<i32>} : memref<16x128xf32, #tpu.memory_space<vmem>>, vector<16x128xf32>,
    return
  }
  func.func @transform_0(%arg0: i32) -> (i32, i32) {
    %c0_i32 = arith.constant 0 : i32
    %c0_i32_0 = arith.constant 0 : i32
    return %arg0, %c0_i32 : i32, i32
  }
  func.func @transform_1(%arg0: i32) -> (i32, i32) {
    %c0_i32 = arith.constant 0 : i32
    %c0_i32_0 = arith.constant 0 : i32
    %c0_i32_1 = arith.constant 0 : i32
    return %c0_i32, %c0_i32_0 : i32, i32
  }
  func.func @transform_2(%arg0: i32) -> (i32, i32) {
    %c0_i32 = arith.constant 0 : i32
    %c0_i32_0 = arith.constant 0 : i32
    %c0_i32_1 = arith.constant 0 : i32
    return %c0_i32, %c0_i32_0 : i32, i32
  }
  func.func @transform_3(%arg0: i32) -> (i32, i32) {
    %c0_i32 = arith.constant 0 : i32
    %c0_i32_0 = arith.constant 0 : i32
    %c0_i32_1 = arith.constant 0 : i32
    return %c0_i32, %c0_i32_0 : i32, i32
  }
  func.func @transform_4(%arg0: i32) -> (i32, i32) {
    %c0_i32 = arith.constant 0 : i32
    %c0_i32_0 = arith.constant 0 : i32
    %c0_i32_1 = arith.constant 0 : i32
    return %c0_i32, %c0_i32_0 : i32, i32
  }
  func.func @transform_5(%arg0: i32) -> (i32, i32) {
    %c0_i32 = arith.constant 0 : i32
    %c0_i32_0 = arith.constant 0 : i32
    %c0_i32_1 = arith.constant 0 : i32
    return %c0_i32, %c0_i32_0 : i32, i32
  }
  func.func @transform_6(%arg0: i32) -> (i32, i32) {
    %c0_i32 = arith.constant 0 : i32
    %c0_i32_0 = arith.constant 0 : i32
    %c0_i32_1 = arith.constant 0 : i32
    return %c0_i32, %c0_i32_0 : i32, i32
  }
  func.func @transform_7(%arg0: i32) -> (i32, i32) {
    %c0_i32 = arith.constant 0 : i32
    %c0_i32_0 = arith.constant 0 : i32
    return %arg0, %c0_i32 : i32, i32
  }
}

</mosaic_0001>

<llo_original>
// kernel: fwd.1
$region0: #{fwd.1}
  #allocation0 [shape = 'u32[]', space=smem, size = 0x4, offset = 0x4, fixed_abs, tag = 'smem constant byte address 0x4 - core index']
  #allocation1 [shape = 'u32[144,128]{1,0:T(1,128)}', space=vmem, size = 0x12000, scoped, tag = 'internal scratch']
  %s0 = inlined_call_operand.vmem [shape: f32[16,128], index: 0, kind: input, shape index: {}]
  %s1 = inlined_call_operand.hbm [shape: f32[128,256], index: 1, kind: input, shape index: {}]
  %s2 = inlined_call_operand.vmem [shape: f32[1,256], index: 2, kind: input, shape index: {}]
  %s3 = inlined_call_operand.hbm [shape: f32[128,128], index: 3, kind: input, shape index: {}]
  %s4 = inlined_call_operand.vmem [shape: f32[1,128], index: 4, kind: input, shape index: {}]
  %s5 = inlined_call_operand.hbm [shape: f32[128,128], index: 5, kind: input, shape index: {}]
  %s6 = inlined_call_operand.vmem [shape: f32[1,128], index: 6, kind: input, shape index: {}]
  %s7 = inlined_call_operand.vmem [shape: f32[16,128], index: 7, kind: output, shape index: {}]
  %s8 = sld [smem:[#allocation0]]
  $region50: #{fwd.1} parent=0
    _
  %s10 = ssub.s32 1, %s8
  %s11 = scalar_select 0, %s10, %s8
  $region1: #{fwd.1} parent=0
    #allocation2 [shape = 'u8[131072]{0}', space=vmem, size = 0x20000, scoped, tag = 'input window, operand 1, single buffered']
    #allocation3 [shape = 's32[1]{0}', space=sflag, size = 0x4, scoped, tag = 'scoped memory for fwd.1']
    #allocation4 [shape = 'u8[65536]{0}', space=vmem, size = 0x10000, scoped, tag = 'input window, operand 3, single buffered']
    #allocation5 [shape = 's32[1]{0}', space=sflag, size = 0x4, scoped, tag = 'scoped memory for fwd.1']
    #allocation6 [shape = 'u8[65536]{0}', space=vmem, size = 0x10000, scoped, tag = 'input window, operand 5, single buffered']
    %12 = vsyncpa [#allocation3], 0
    %13 = vsyncpa [#allocation5], 0
    // Predicated region
    $region2: #{fwd.1} parent=1 // pred_check
      _
    $region3: #{fwd.1} parent=1 // pred_check_branch
      %15 = sbr.rel (0) target = $region5
    $region4: #{fwd.1} parent=1 // pred_region
      _
    $region5: #{fwd.1} parent=1 // pred_fallthru
      _
    // Predicated region
    $region6: #{fwd.1} parent=1 // pred_check
      _
    $region7: #{fwd.1} parent=1 // pred_check_branch
      %17 = sbr.rel (0) target = $region9
    $region8: #{fwd.1} parent=1 // pred_region
      %s19 = ssub.s32 4096, 4096
      %20 = vsyncadd [#allocation3], %s19
      %s21 = sshll.u32 [#allocation2], 4
      %s22 = int_to_ptr.vmem [resolvable:$true] %s21
      %27 = dma.hbm_to_vmem [thread:$0]  %s1, 4096, %s22, [#allocation3], 256, 256, 16
    $region9: #{fwd.1} parent=1 // pred_fallthru
      _
    // Predicated region
    $region10: #{fwd.1} parent=1 // pred_check
      _
    $region11: #{fwd.1} parent=1 // pred_check_branch
      %29 = sbr.rel (0) target = $region13
    $region12: #{fwd.1} parent=1 // pred_region
      _
    $region13: #{fwd.1} parent=1 // pred_fallthru
      _
    // Predicated region
    $region14: #{fwd.1} parent=1 // pred_check
      _
    $region15: #{fwd.1} parent=1 // pred_check_branch
      %31 = sbr.rel (0) target = $region17
    $region16: #{fwd.1} parent=1 // pred_region
      %s33 = ssub.s32 2048, 2048
      %34 = vsyncadd [#allocation5], %s33
      %s35 = sshll.u32 [#allocation4], 4
      %s36 = int_to_ptr.vmem [resolvable:$true] %s35
      %41 = dma.hbm_to_vmem [thread:$0]  %s3, 2048, %s36, [#allocation5], 128, 128, 8
    $region17: #{fwd.1} parent=1 // pred_fallthru
      _
    // Predicated region
    $region18: #{fwd.1} parent=1 // pred_check
      _
    $region19: #{fwd.1} parent=1 // pred_check_branch
      %43 = sbr.rel (0) target = $region21
    $region20: #{fwd.1} parent=1 // pred_region
      _
    $region21: #{fwd.1} parent=1 // pred_fallthru
      _
    // Predicated region
    $region22: #{fwd.1} parent=1 // pred_check
      _
    $region23: #{fwd.1} parent=1 // pred_check_branch
      %45 = sbr.rel (0) target = $region25
    $region24: #{fwd.1} parent=1 // pred_region
      %s47 = ssub.s32 2048, 2048
      %48 = vsyncadd [#allocation5], %s47
      %s49 = sshll.u32 [#allocation6], 4
      %s50 = int_to_ptr.vmem [resolvable:$true] %s49
      %55 = dma.hbm_to_vmem [thread:$0]  %s5, 2048, %s50, [#allocation5], 128, 128, 8
    $region25: #{fwd.1} parent=1 // pred_fallthru
      _
    // Predicated region
    $region26: #{fwd.1} parent=1 // pred_check
      _
    $region27: #{fwd.1} parent=1 // pred_check_branch
      %57 = sbr.rel (0) target = $region29
    $region28: #{fwd.1} parent=1 // pred_region
      _
    $region29: #{fwd.1} parent=1 // pred_fallthru
      _
    // Predicated region
    $region30: #{fwd.1} parent=1 // pred_check
      _
    $region31: #{fwd.1} parent=1 // pred_check_branch
      %59 = sbr.rel (0) target = $region33
    $region32: #{fwd.1} parent=1 // pred_region
      %60 = dma.done [#allocation3], 4096
    $region33: #{fwd.1} parent=1 // pred_fallthru
      _
    // Predicated region
    $region34: #{fwd.1} parent=1 // pred_check
      _
    $region35: #{fwd.1} parent=1 // pred_check_branch
      %62 = sbr.rel (0) target = $region37
    $region36: #{fwd.1} parent=1 // pred_region
      %63 = dma.done [#allocation5], 2048
    $region37: #{fwd.1} parent=1 // pred_fallthru
      _
    // Predicated region
    $region38: #{fwd.1} parent=1 // pred_check
      _
    $region39: #{fwd.1} parent=1 // pred_check_branch
      %65 = sbr.rel (0) target = $region41
    $region40: #{fwd.1} parent=1 // pred_region
      %66 = dma.done [#allocation5], 2048
    $region41: #{fwd.1} parent=1 // pred_fallthru
      _
    %v67 = vld [vmem:[%s0] sm:$0xff]
    %v68 = vld [vmem:[%s0 + $0x8] sm:$0xff]
    %v69 = vld [vmem:[#allocation2] sm:$0xff]
    %v70 = vld [vmem:[#allocation2 + $0x8] sm:$0xff]
    %v71 = vld [vmem:[#allocation2 + $0x10] sm:$0xff]
    %v72 = vld [vmem:[#allocation2 + $0x18] sm:$0xff]
    %v73 = vld [vmem:[#allocation2 + $0x20] sm:$0xff]
    %v74 = vld [vmem:[#allocation2 + $0x28] sm:$0xff]
    %v75 = vld [vmem:[#allocation2 + $0x30] sm:$0xff]
    %v76 = vld [vmem:[#allocation2 + $0x38] sm:$0xff]
    %v77 = vld [vmem:[#allocation2 + $0x40] sm:$0xff]
    %v78 = vld [vmem:[#allocation2 + $0x48] sm:$0xff]
    %v79 = vld [vmem:[#allocation2 + $0x50] sm:$0xff]
    %v80 = vld [vmem:[#allocation2 + $0x58] sm:$0xff]
    %v81 = vld [vmem:[#allocation2 + $0x60] sm:$0xff]
    %v82 = vld [vmem:[#allocation2 + $0x68] sm:$0xff]
    %v83 = vld [vmem:[#allocation2 + $0x70] sm:$0xff]
    %v84 = vld [vmem:[#allocation2 + $0x78] sm:$0xff]
    %v85 = vld [vmem:[#allocation2 + $0x80] sm:$0xff]
    %v86 = vld [vmem:[#allocation2 + $0x88] sm:$0xff]
    %v87 = vld [vmem:[#allocation2 + $0x90] sm:$0xff]
    %v88 = vld [vmem:[#allocation2 + $0x98] sm:$0xff]
    %v89 = vld [vmem:[#allocation2 + $0xa0] sm:$0xff]
    %v90 = vld [vmem:[#allocation2 + $0xa8] sm:$0xff]
    %v91 = vld [vmem:[#allocation2 + $0xb0] sm:$0xff]
    %v92 = vld [vmem:[#allocation2 + $0xb8] sm:$0xff]
    %v93 = vld [vmem:[#allocation2 + $0xc0] sm:$0xff]
    %v94 = vld [vmem:[#allocation2 + $0xc8] sm:$0xff]
    %v95 = vld [vmem:[#allocation2 + $0xd0] sm:$0xff]
    %v96 = vld [vmem:[#allocation2 + $0xd8] sm:$0xff]
    %v97 = vld [vmem:[#allocation2 + $0xe0] sm:$0xff]
    %v98 = vld [vmem:[#allocation2 + $0xe8] sm:$0xff]
    %v99 = vld [vmem:[#allocation2 + $0xf0] sm:$0xff]
    %v100 = vld [vmem:[#allocation2 + $0xf8] sm:$0xff]
    %v101 = vld [vmem:[%s2] sm:$0x3]
    %v103 = vlaneseq
    %v104 = vshrl.u32 %v103, 7
    %v105 = vsub.s32 0, %v104
    %v106 = vrot.slane %v101, %v105
    %v107 = vlaneseq
    %v108 = vshrl.u32 %v107, 7
    %v109 = vsub.s32 1, %v108
    %v110 = vrot.slane %v101, %v109
    %113 = vmatprep.subr.mxu0 %v70
    %114 = vmatpush1.msra.mxu0 %v69
    %115 = vmatprep.subr.mxu0 %v72
    %116 = vmatpush1.msra.mxu0 %v71
    %117 = vmatprep.subr.mxu0 %v74
    %118 = vmatpush1.msra.mxu0 %v73
    %119 = vmatprep.subr.mxu0 %v76
    %120 = vmatpush1.msra.mxu0 %v75
    %121 = vmatprep.subr.mxu0 %v78
    %122 = vmatpush1.msra.mxu0 %v77
    %123 = vmatprep.subr.mxu0 %v80
    %124 = vmatpush1.msra.mxu0 %v79
    %125 = vmatprep.subr.mxu0 %v82
    %126 = vmatpush1.msra.mxu0 %v81
    %127 = vmatprep.subr.mxu0 %v84
    %128 = vmatpush1.msra.mxu0 %v83
    %129 = vmatprep.subr.mxu0 %v86
    %130 = vmatpush1.msra.mxu0 %v85
    %131 = vmatprep.subr.mxu0 %v88
    %132 = vmatpush1.msra.mxu0 %v87
    %133 = vmatprep.subr.mxu0 %v90
    %134 = vmatpush1.msra.mxu0 %v89
    %135 = vmatprep.subr.mxu0 %v92
    %136 = vmatpush1.msra.mxu0 %v91
    %137 = vmatprep.subr.mxu0 %v94
    %138 = vmatpush1.msra.mxu0 %v93
    %139 = vmatprep.subr.mxu0 %v96
    %140 = vmatpush1.msra.mxu0 %v95
    %141 = vmatprep.subr.mxu0 %v98
    %142 = vmatpush1.msra.mxu0 %v97
    %143 = vmatprep.subr.mxu0 %v100
    %144 = vmatpush1.msra.mxu0 %v99
    %145 = vmatprep.subr.mxu0 0.0
    %146 = vmatpush1.msra.mxu0 0.0
    %147 = vmatprep.subr.mxu0 0.0
    %148 = vmatpush1.msra.mxu0 0.0
    %149 = vmatprep.subr.mxu0 0.0
    %150 = vmatpush1.msra.mxu0 0.0
    %151 = vmatprep.subr.mxu0 0.0
    %152 = vmatpush1.msra.mxu0 0.0
    %153 = vmatprep.subr.mxu0 0.0
    %154 = vmatpush1.msra.mxu0 0.0
    %155 = vmatprep.subr.mxu0 0.0
    %156 = vmatpush1.msra.mxu0 0.0
    %157 = vmatprep.subr.mxu0 0.0
    %158 = vmatpush1.msra.mxu0 0.0
    %159 = vmatprep.subr.mxu0 0.0
    %160 = vmatpush1.msra.mxu0 0.0
    %161 = vmatprep.subr.mxu0 0.0
    %162 = vmatpush1.msra.mxu0 0.0
    %163 = vmatprep.subr.mxu0 0.0
    %164 = vmatpush1.msra.mxu0 0.0
    %165 = vmatprep.subr.mxu0 0.0
    %166 = vmatpush1.msra.mxu0 0.0
    %167 = vmatprep.subr.mxu0 0.0
    %168 = vmatpush1.msra.mxu0 0.0
    %169 = vmatprep.subr.mxu0 0.0
    %170 = vmatpush1.msra.mxu0 0.0
    %171 = vmatprep.subr.mxu0 0.0
    %172 = vmatpush1.msra.mxu0 0.0
    %173 = vmatprep.subr.mxu0 0.0
    %174 = vmatpush1.msra.mxu0 0.0
    %175 = vmatprep.subr.mxu0 0.0
    %176 = vmatpush1.msra.mxu0 0.0
    %177 = vmatprep.mubr.f32.mxu0 0.0
    %178 = vmatmul.mubr.f32.gmra.mrb[0].mxu0 %v67
    %v179 = vpop.f32.mrb[0].mxu0
    %v180 = vadd.f32 %v106, %v179
    %v181 = vpop.f32.mrb[0].mxu0
    %v182 = vadd.f32 %v110, %v181
    %183 = vmatprep.mubr.f32.mxu0 0.0
    %184 = vmatmul.mubr.f32.gmra.mrb[0].mxu0 %v68
    %v185 = vpop.f32.mrb[0].mxu0
    %v186 = vadd.f32 %v106, %v185
    %v187 = vpop.f32.mrb[0].mxu0
    %v188 = vadd.f32 %v110, %v187
    %189 = vdwg.mxu0
    %v190 = vmax.f32 %v180, 0.0
    %v191 = vmax.f32 %v182, 0.0
    %v192 = vmax.f32 %v186, 0.0
    %v193 = vmax.f32 %v188, 0.0
    %v194 = vmax.f32 %v190, %v191
    %v195 = vmax.f32 %v192, %v193
    %v196 = vld [vmem:[#allocation4] sm:$0xff]
    %v197 = vld [vmem:[#allocation4 + $0x8] sm:$0xff]
    %v198 = vld [vmem:[#allocation4 + $0x10] sm:$0xff]
    %v199 = vld [vmem:[#allocation4 + $0x18] sm:$0xff]
    %v200 = vld [vmem:[#allocation4 + $0x20] sm:$0xff]
    %v201 = vld [vmem:[#allocation4 + $0x28] sm:$0xff]
    %v202 = vld [vmem:[#allocation4 + $0x30] sm:$0xff]
    %v203 = vld [vmem:[#allocation4 + $0x38] sm:$0xff]
    %v204 = vld [vmem:[#allocation4 + $0x40] sm:$0xff]
    %v205 = vld [vmem:[#allocation4 + $0x48] sm:$0xff]
    %v206 = vld [vmem:[#allocation4 + $0x50] sm:$0xff]
    %v207 = vld [vmem:[#allocation4 + $0x58] sm:$0xff]
    %v208 = vld [vmem:[#allocation4 + $0x60] sm:$0xff]
    %v209 = vld [vmem:[#allocation4 + $0x68] sm:$0xff]
    %v210 = vld [vmem:[#allocation4 + $0x70] sm:$0xff]
    %v211 = vld [vmem:[#allocation4 + $0x78] sm:$0xff]
    %v212 = vld [vmem:[%s4] sm:$0x1]
    %v214 = vlaneseq
    %v215 = vshrl.u32 %v214, 7
    %v216 = vsub.s32 0, %v215
    %v217 = vrot.slane %v212, %v216
    %219 = vmatprep.subr.mxu0 0.0
    %220 = vmatpush1.msra.mxu0 %v196
    %221 = vmatprep.subr.mxu0 0.0
    %222 = vmatpush1.msra.mxu0 %v197
    %223 = vmatprep.subr.mxu0 0.0
    %224 = vmatpush1.msra.mxu0 %v198
    %225 = vmatprep.subr.mxu0 0.0
    %226 = vmatpush1.msra.mxu0 %v199
    %227 = vmatprep.subr.mxu0 0.0
    %228 = vmatpush1.msra.mxu0 %v200
    %229 = vmatprep.subr.mxu0 0.0
    %230 = vmatpush1.msra.mxu0 %v201
    %231 = vmatprep.subr.mxu0 0.0
    %232 = vmatpush1.msra.mxu0 %v202
    %233 = vmatprep.subr.mxu0 0.0
    %234 = vmatpush1.msra.mxu0 %v203
    %235 = vmatprep.subr.mxu0 0.0
    %236 = vmatpush1.msra.mxu0 %v204
    %237 = vmatprep.subr.mxu0 0.0
    %238 = vmatpush1.msra.mxu0 %v205
    %239 = vmatprep.subr.mxu0 0.0
    %240 = vmatpush1.msra.mxu0 %v206
    %241 = vmatprep.subr.mxu0 0.0
    %242 = vmatpush1.msra.mxu0 %v207
    %243 = vmatprep.subr.mxu0 0.0
    %244 = vmatpush1.msra.mxu0 %v208
    %245 = vmatprep.subr.mxu0 0.0
    %246 = vmatpush1.msra.mxu0 %v209
    %247 = vmatprep.subr.mxu0 0.0
    %248 = vmatpush1.msra.mxu0 %v210
    %249 = vmatprep.subr.mxu0 0.0
    %250 = vmatpush1.msra.mxu0 %v211
    %251 = vmatprep.subr.mxu0 0.0
    %252 = vmatpush1.msra.mxu0 0.0
    %253 = vmatprep.subr.mxu0 0.0
    %254 = vmatpush1.msra.mxu0 0.0
    %255 = vmatprep.subr.mxu0 0.0
    %256 = vmatpush1.msra.mxu0 0.0
    %257 = vmatprep.subr.mxu0 0.0
    %258 = vmatpush1.msra.mxu0 0.0
    %259 = vmatprep.subr.mxu0 0.0
    %260 = vmatpush1.msra.mxu0 0.0
    %261 = vmatprep.subr.mxu0 0.0
    %262 = vmatpush1.msra.mxu0 0.0
    %263 = vmatprep.subr.mxu0 0.0
    %264 = vmatpush1.msra.mxu0 0.0
    %265 = vmatprep.subr.mxu0 0.0
    %266 = vmatpush1.msra.mxu0 0.0
    %267 = vmatprep.subr.mxu0 0.0
    %268 = vmatpush1.msra.mxu0 0.0
    %269 = vmatprep.subr.mxu0 0.0
    %270 = vmatpush1.msra.mxu0 0.0
    %271 = vmatprep.subr.mxu0 0.0
    %272 = vmatpush1.msra.mxu0 0.0
    %273 = vmatprep.subr.mxu0 0.0
    %274 = vmatpush1.msra.mxu0 0.0
    %275 = vmatprep.subr.mxu0 0.0
    %276 = vmatpush1.msra.mxu0 0.0
    %277 = vmatprep.subr.mxu0 0.0
    %278 = vmatpush1.msra.mxu0 0.0
    %279 = vmatprep.subr.mxu0 0.0
    %280 = vmatpush1.msra.mxu0 0.0
    %281 = vmatprep.subr.mxu0 0.0
    %282 = vmatpush1.msra.mxu0 0.0
    %283 = vmatprep.mubr.f32.mxu0 0.0
    %284 = vmatmul.mubr.f32.gmra.mrb[0].mxu0 %v194
    %v285 = vpop.f32.mrb[0].mxu0
    %v286 = vadd.f32 %v217, %v285
    %v287 = vpop.f32.mrb[0].mxu0
    %288 = vmatprep.mubr.f32.mxu0 0.0
    %289 = vmatmul.mubr.f32.gmra.mrb[0].mxu0 %v195
    %v290 = vpop.f32.mrb[0].mxu0
    %v291 = vadd.f32 %v217, %v290
    %v292 = vpop.f32.mrb[0].mxu0
    %293 = vdwg.mxu0
    %v294 = vmax.f32 %v286, 0.0
    %v295 = vmax.f32 %v291, 0.0
    %v296 = vld [vmem:[#allocation6] sm:$0xff]
    %v297 = vld [vmem:[#allocation6 + $0x8] sm:$0xff]
    %v298 = vld [vmem:[#allocation6 + $0x10] sm:$0xff]
    %v299 = vld [vmem:[#allocation6 + $0x18] sm:$0xff]
    %v300 = vld [vmem:[#allocation6 + $0x20] sm:$0xff]
    %v301 = vld [vmem:[#allocation6 + $0x28] sm:$0xff]
    %v302 = vld [vmem:[#allocation6 + $0x30] sm:$0xff]
    %v303 = vld [vmem:[#allocation6 + $0x38] sm:$0xff]
    %v304 = vld [vmem:[#allocation6 + $0x40] sm:$0xff]
    %v305 = vld [vmem:[#allocation6 + $0x48] sm:$0xff]
    %v306 = vld [vmem:[#allocation6 + $0x50] sm:$0xff]
    %v307 = vld [vmem:[#allocation6 + $0x58] sm:$0xff]
    %v308 = vld [vmem:[#allocation6 + $0x60] sm:$0xff]
    %v309 = vld [vmem:[#allocation6 + $0x68] sm:$0xff]
    %v310 = vld [vmem:[#allocation6 + $0x70] sm:$0xff]
    %v311 = vld [vmem:[#allocation6 + $0x78] sm:$0xff]
    %v312 = vld [vmem:[%s6] sm:$0x1]
    %v314 = vlaneseq
    %v315 = vshrl.u32 %v314, 7
    %v316 = vsub.s32 0, %v315
    %v317 = vrot.slane %v312, %v316
    %319 = vmatprep.subr.mxu0 0.0
    %320 = vmatpush1.msra.mxu0 %v296
    %321 = vmatprep.subr.mxu0 0.0
    %322 = vmatpush1.msra.mxu0 %v297
    %323 = vmatprep.subr.mxu0 0.0
    %324 = vmatpush1.msra.mxu0 %v298
    %325 = vmatprep.subr.mxu0 0.0
    %326 = vmatpush1.msra.mxu0 %v299
    %327 = vmatprep.subr.mxu0 0.0
    %328 = vmatpush1.msra.mxu0 %v300
    %329 = vmatprep.subr.mxu0 0.0
    %330 = vmatpush1.msra.mxu0 %v301
    %331 = vmatprep.subr.mxu0 0.0
    %332 = vmatpush1.msra.mxu0 %v302
    %333 = vmatprep.subr.mxu0 0.0
    %334 = vmatpush1.msra.mxu0 %v303
    %335 = vmatprep.subr.mxu0 0.0
    %336 = vmatpush1.msra.mxu0 %v304
    %337 = vmatprep.subr.mxu0 0.0
    %338 = vmatpush1.msra.mxu0 %v305
    %339 = vmatprep.subr.mxu0 0.0
    %340 = vmatpush1.msra.mxu0 %v306
    %341 = vmatprep.subr.mxu0 0.0
    %342 = vmatpush1.msra.mxu0 %v307
    %343 = vmatprep.subr.mxu0 0.0
    %344 = vmatpush1.msra.mxu0 %v308
    %345 = vmatprep.subr.mxu0 0.0
    %346 = vmatpush1.msra.mxu0 %v309
    %347 = vmatprep.subr.mxu0 0.0
    %348 = vmatpush1.msra.mxu0 %v310
    %349 = vmatprep.subr.mxu0 0.0
    %350 = vmatpush1.msra.mxu0 %v311
    %351 = vmatprep.subr.mxu0 0.0
    %352 = vmatpush1.msra.mxu0 0.0
    %353 = vmatprep.subr.mxu0 0.0
    %354 = vmatpush1.msra.mxu0 0.0
    %355 = vmatprep.subr.mxu0 0.0
    %356 = vmatpush1.msra.mxu0 0.0
    %357 = vmatprep.subr.mxu0 0.0
    %358 = vmatpush1.msra.mxu0 0.0
    %359 = vmatprep.subr.mxu0 0.0
    %360 = vmatpush1.msra.mxu0 0.0
    %361 = vmatprep.subr.mxu0 0.0
    %362 = vmatpush1.msra.mxu0 0.0
    %363 = vmatprep.subr.mxu0 0.0
    %364 = vmatpush1.msra.mxu0 0.0
    %365 = vmatprep.subr.mxu0 0.0
    %366 = vmatpush1.msra.mxu0 0.0
    %367 = vmatprep.subr.mxu0 0.0
    %368 = vmatpush1.msra.mxu0 0.0
    %369 = vmatprep.subr.mxu0 0.0
    %370 = vmatpush1.msra.mxu0 0.0
    %371 = vmatprep.subr.mxu0 0.0
    %372 = vmatpush1.msra.mxu0 0.0
    %373 = vmatprep.subr.mxu0 0.0
    %374 = vmatpush1.msra.mxu0 0.0
    %375 = vmatprep.subr.mxu0 0.0
    %376 = vmatpush1.msra.mxu0 0.0
    %377 = vmatprep.subr.mxu0 0.0
    %378 = vmatpush1.msra.mxu0 0.0
    %379 = vmatprep.subr.mxu0 0.0
    %380 = vmatpush1.msra.mxu0 0.0
    %381 = vmatprep.subr.mxu0 0.0
    %382 = vmatpush1.msra.mxu0 0.0
    %383 = vmatprep.mubr.f32.mxu0 0.0
    %384 = vmatmul.mubr.f32.gmra.mrb[0].mxu0 %v294
    %v385 = vpop.f32.mrb[0].mxu0
    %v386 = vadd.f32 %v317, %v385
    %v387 = vpop.f32.mrb[0].mxu0
    %388 = vmatprep.mubr.f32.mxu0 0.0
    %389 = vmatmul.mubr.f32.gmra.mrb[0].mxu0 %v295
    %v390 = vpop.f32.mrb[0].mxu0
    %v391 = vadd.f32 %v317, %v390
    %v392 = vpop.f32.mrb[0].mxu0
    %393 = vdwg.mxu0
    %394 = vst [vmem:[%s7] sm:$0xff] %v386
    %395 = vst [vmem:[%s7 + $0x8] sm:$0xff] %v391
    // Predicated region
    $region42: #{fwd.1} parent=1 // pred_check
      _
    $region43: #{fwd.1} parent=1 // pred_check_branch
      %397 = sbr.rel (0) target = $region45
    $region44: #{fwd.1} parent=1 // pred_region
      _
    $region45: #{fwd.1} parent=1 // pred_fallthru
      _
    // Predicated region
    $region46: #{fwd.1} parent=1 // pred_check
      _
    $region47: #{fwd.1} parent=1 // pred_check_branch
      %399 = sbr.rel (0) target = $region49
    $region48: #{fwd.1} parent=1 // pred_region
      _
    $region49: #{fwd.1} parent=1 // pred_fallthru
      _
    %400 = vsyncpa [#allocation3], 1
    %401 = vsyncpa [#allocation5], 1

</llo_original>
